<compile_context>
chip_gen: v6e
topology: v6e:2x2x1
jax: 0.10.0
libtpu: 0.0.40
codegen_flags: <defaults>
</compile_context>

<pallas_src>
import functools
import math

import numpy as np

import jax
import jax.numpy as jnp
from jax.experimental import pallas as pl
from jax.experimental.pallas import tpu as pltpu


# ----------------------------------------------------------------------------
# Kernel
# ----------------------------------------------------------------------------
def _graph_loss_kernel(xs_ref, xt_ref,
                       w1t_s_ref, w2et_s_ref, b2e_s_ref, w3b_s_ref, b3_s_ref,
                       w1t_t_ref, w2et_t_ref, b2e_t_ref, w3b_t_ref, b3_t_ref,
                       seg_ref, inter_ref, union_ref,
                       *, matmul_dtype, approx_sigmoid):
    """One grid step = one block of `block_b` batches, folded to R = block_b*C rows."""

    def branch(x_ref, w1t_ref, w2et_ref, b2e_ref, w3b_ref, b3_ref):
        x = x_ref[...]                                   # (R, L) in the caller's dtype
        if x.dtype != matmul_dtype:
            # In-kernel (VMEM) cast: the HBM stream stays in the caller's dtype.
            x = x.astype(matmul_dtype)
        # build_node: one batch-folded matmul (the only "big" op: HBM-bound on x).
        xn = jnp.dot(x, w1t_ref[...],
                     preferred_element_type=jnp.float32)                    # (R, N)
        # node_conv + residual (+ b1) folded into (W2+I)^T and b2_eff.
        v = jnp.dot(xn.astype(matmul_dtype), w2et_ref[...],
                    preferred_element_type=jnp.float32) + b2e_ref[...]      # (R, N)
        # channel_conv, batch-folded with the block-diagonal kron(I_bb, W3).
        y = jnp.dot(w3b_ref[...], v.astype(matmul_dtype),
                    preferred_element_type=jnp.float32) + b3_ref[...]       # (R, N)
        y = jnp.maximum(y, 0.0)                                             # ReLU
        # sigmoid(y) = 1 / (1 + exp(-y)); divide goes to the EUP slot.
        return pl.reciprocal(1.0 + jnp.exp(-y), approx=approx_sigmoid)      # f32

    p = branch(xs_ref, w1t_s_ref, w2et_s_ref, b2e_s_ref, w3b_s_ref, b3_s_ref)
    m = branch(xt_ref, w1t_t_ref, w2et_t_ref, b2e_t_ref, w3b_t_ref, b3_t_ref)

    # Segmented (per-batch) reduction: seg[i, b*C + c] = (i == b).
    # union = sum(p) + sum(m): never materializes the (R, N) array p + m.
    seg = seg_ref[...]                                                      # (bb, R) f32
    pms = jnp.dot(seg, p * m, preferred_element_type=jnp.float32)           # (bb, N)
    ps = jnp.dot(seg, p, preferred_element_type=jnp.float32)                # (bb, N)
    ms = jnp.dot(seg, m, preferred_element_type=jnp.float32)                # (bb, N)

    inter_ref[0] = jnp.sum(pms, axis=1, keepdims=True)                      # (bb, 1)
    union_ref[0] = (jnp.sum(ps, axis=1, keepdims=True)
                    + jnp.sum(ms, axis=1, keepdims=True))


# ----------------------------------------------------------------------------
# Wrapper helpers
# ----------------------------------------------------------------------------
def _vmem_capacity_bytes():
    """Per-core VMEM capacity; conservative (v7x) fallback if unqueryable."""
    try:
        return int(pltpu.get_tpu_info().vmem_capacity_bytes)
    except Exception:
        return 64 * 1024 * 1024


def _pick_block_b(B, C, L, x_elem_bytes, vmem_cap):
    """Roofline/VMEM-driven batch block size.

    * VMEM cap: the two x streams are double-buffered, so
        2 inputs * 2 buffers * block_b*C*L*itemsize  <=  ~3/8 of VMEM
      (24 MiB on v7x's 64 MiB/TC, 48 MiB on v5e/v6e's 128 MiB), leaving the
      rest for weights, activations and compiler scratch.
    * DMA target: per-step x traffic >= ~1 MiB so the ~0.35 us grid-step
      overhead is noise and the HBM roofline is reachable.
    * Prefer >= 2 grid steps when B >= 2: v7x has 2 TensorCores sharing the
      "parallel" batch axis; this costs <1% on 1-TC chips once the DMA target
      is met.
    * Sublane tiling: block_b*C must be a multiple of 8 unless block_b == B.
    """
    per_batch_vmem = max(2 * 2 * C * L * x_elem_bytes, 1)
    max_bb = max(1, int(0.375 * vmem_cap) // per_batch_vmem)
    valid = [bb for bb in range(1, B + 1)
             if B % bb == 0 and ((bb * C) % 8 == 0 or bb == B)]
    capped = [bb for bb in valid if bb <= max_bb] or [min(valid)]

    def dma_ok(bb):
        return 2 * bb * C * L * x_elem_bytes >= (1 << 20)

    two_step = [bb for bb in capped if B // bb >= 2]
    for cands in ([bb for bb in two_step if dma_ok(bb)],
                  two_step,
                  [bb for bb in capped if dma_ok(bb)],
                  capped):
        if cands:
            return max(cands)
    return 1


def _prepare_branch_params(params, block_b, matmul_dtype):
    """One-time wrapper-side algebra (tiny arrays, traced once).

    Folds the residual + b1 into node_conv, pre-transposes for the
    C-on-sublane layout, and batch-folds channel_conv into a block-diagonal
    kron(I_block_b, W3) with a tiled bias column.
    """
    w1, b1, w2, b2, w3, b3 = params
    n = w1.shape[0]
    c = w3.shape[0]
    w2e = w2 + jnp.eye(n, dtype=w2.dtype)                          # W2 + I
    b2e = (w2e @ b1 + b2).reshape(1, n).astype(jnp.float32)        # (1, N) row, f32
    w3b = jnp.kron(jnp.eye(block_b, dtype=w3.dtype), w3)           # (bb*C, bb*C)
    b3b = jnp.tile(b3.reshape(c, 1), (block_b, 1)).astype(jnp.float32)  # (bb*C, 1)
    return (w1.T.astype(matmul_dtype),                             # W1^T      (L, N)
            w2e.T.astype(matmul_dtype),                            # (W2+I)^T  (N, N)
            b2e,                                                   # b2_eff    (1, N)
            w3b.astype(matmul_dtype),                              # blkdiag W3
            b3b)                                                   # b3 tiled  (bb*C, 1)


# ----------------------------------------------------------------------------
# Wrapper
# ----------------------------------------------------------------------------
def graph_loss(student, teacher, params_student, params_teacher, *,
               compute_dtype=None, block_b=None, approx_sigmoid=True,
               return_stats=False):
    """Fused Graph_loss forward. student/teacher: (B, C, H, W). Returns scalar loss.

    compute_dtype=None -> MXU operands use the activations' native dtype
    (no wrapper-side cast of x).  Passing jnp.bfloat16 with f32 inputs casts
    the x tiles inside the kernel (VMEM), keeping the HBM stream in f32.
    """
    B, C, H, W = student.shape
    assert teacher.shape == student.shape
    L = H * W

    matmul_dtype = (np.dtype(compute_dtype) if compute_dtype is not None
                    else np.dtype(student.dtype))

    # Native layout: (B, C, H, W) -> (B*C, L) is a free contiguous reshape.
    xs = student.reshape(B * C, L)
    xt = teacher.reshape(B * C, L)
    x_bytes = xs.dtype.itemsize

    vmem_cap = _vmem_capacity_bytes()
    if block_b is None:
        block_b = _pick_block_b(B, C, L, x_bytes, vmem_cap)
    assert B % block_b == 0, "batch must be divisible by block_b"
    assert (block_b * C) % 8 == 0 or block_b == B, \
        "block_b*C must be a multiple of 8 (sublane tiling) unless block_b == B"
    nsteps = B // block_b
    R = block_b * C

    prep_s = _prepare_branch_params(params_student, block_b, matmul_dtype)
    prep_t = _prepare_branch_params(params_teacher, block_b, matmul_dtype)
    seg = jnp.kron(jnp.eye(block_b, dtype=jnp.float32),
                   jnp.ones((1, C), dtype=jnp.float32))            # (block_b, R)

    def const_spec(arr):
        nd = arr.ndim
        return pl.BlockSpec(arr.shape, lambda b, _nd=nd: (0,) * _nd)

    # TODO(synk): for C*L blocks too large even at block_b=1 (v7x, 64 MiB VMEM),
    # add an "arbitrary" L grid axis with an (R, N) f32 accumulator.
    x_spec = pl.BlockSpec((R, L), lambda b: (b, 0))
    out_spec = pl.BlockSpec((1, block_b, 1), lambda b: (b, 0, 0))
    in_specs = ([x_spec, x_spec]
                + [const_spec(a) for a in prep_s]
                + [const_spec(a) for a in prep_t]
                + [const_spec(seg)])

    # Right-sized VMEM limit: x double-buffers + resident weights + activation
    # headroom, with 2x margin, floored at 16 MiB and capped below capacity.
    x_tile_bytes = R * L * x_bytes
    w_bytes = sum(int(a.size) * a.dtype.itemsize for a in (*prep_s, *prep_t, seg))
    n_node = prep_s[0].shape[1]
    act_bytes = 10 * R * max(n_node, 1) * 4
    est = 2 * 2 * x_tile_bytes + 2 * w_bytes + act_bytes + (2 << 20)
    vmem_limit = int(min(0.9 * vmem_cap, max(2 * est, 16 << 20)))

    kernel = functools.partial(_graph_loss_kernel,
                               matmul_dtype=matmul_dtype,
                               approx_sigmoid=approx_sigmoid)

    inter, union = pl.pallas_call(
        kernel,
        out_shape=(jax.ShapeDtypeStruct((nsteps, block_b, 1), jnp.float32),
                   jax.ShapeDtypeStruct((nsteps, block_b, 1), jnp.float32)),
        grid_spec=pltpu.PrefetchScalarGridSpec(
            num_scalar_prefetch=0,
            grid=(nsteps,),
            in_specs=in_specs,
            out_specs=(out_spec, out_spec)),
        compiler_params=pltpu.CompilerParams(
            dimension_semantics=("parallel",),
            vmem_limit_bytes=vmem_limit),
    )(xs, xt, *prep_s, *prep_t, seg)

    inter = inter.reshape(B)
    union = union.reshape(B)
    dice = (2.0 * inter + 1.0) / (union + 1.0)
    loss = jnp.mean(1.0 - dice)
    if return_stats:
        return loss, inter, union
    return loss


# ----------------------------------------------------------------------------
# Parameter init (mimics _init_weight) and pure-JAX reference
# ----------------------------------------------------------------------------
def init_params(key, HW, channel, node):
    """Conv1d weights ~ N(0, sqrt(2/(k*out_channels))), k=1; biases PyTorch-default-ish."""
    ks = jax.random.split(key, 6)
    w1 = jax.random.normal(ks[0], (node, HW), jnp.float32) * math.sqrt(2.0 / node)
    w2 = jax.random.normal(ks[1], (node, node), jnp.float32) * math.sqrt(2.0 / node)
    w3 = jax.random.normal(ks[2], (channel, channel), jnp.float32) * math.sqrt(2.0 / channel)
    b1 = jax.random.uniform(ks[3], (node,), jnp.float32,
                            -1.0 / math.sqrt(HW), 1.0 / math.sqrt(HW))
    b2 = jax.random.uniform(ks[4], (node,), jnp.float32,
                            -1.0 / math.sqrt(node), 1.0 / math.sqrt(node))
    b3 = jax.random.uniform(ks[5], (channel,), jnp.float32,
                            -1.0 / math.sqrt(channel), 1.0 / math.sqrt(channel))
    return (w1, b1, w2, b2, w3, b3)


def _inflection_ref(x, params):
    w1, b1, w2, b2, w3, b3 = params
    B, C, H, W = x.shape
    xp = jnp.transpose(x.reshape(B, C, H * W), (0, 2, 1))                       # (B, L, C)
    xn = jnp.einsum('nl,blc->bnc', w1, xp, precision='highest') + b1[None, :, None]
    v = jnp.einsum('nm,bmc->bnc', w2, xn, precision='highest') + b2[None, :, None] + xn
    vp = jnp.transpose(v, (0, 2, 1))                                            # (B, C, N)
    out = jnp.einsum('cd,bdn->bcn', w3, vp, precision='highest') + b3[None, :, None]
    return jnp.maximum(out, 0.0)


def graph_loss_ref(student, teacher, params_student, params_teacher):
    out_s = _inflection_ref(student, params_student)[None]        # unsqueeze(0)
    out_t = _inflection_ref(teacher, params_teacher)[None]
    pred = jax.nn.sigmoid(out_s)
    mask = jax.nn.sigmoid(out_t)
    intersection = jnp.sum(pred * mask, axis=(2, 3))
    unior = jnp.sum(pred + mask, axis=(2, 3))
    dice = (2.0 * intersection + 1.0) / (unior + 1.0)
    loss = jnp.mean(1.0 - dice)
    return loss, intersection.reshape(-1), unior.reshape(-1)


# ----------------------------------------------------------------------------
# Demo / correctness check
# ----------------------------------------------------------------------------
if __name__ == "__main__":
    B, C, H, W = 2, 4, 16, 16
    L = H * W          # HW ctor arg = 256
    node = 8

    key = jax.random.PRNGKey(0)
    k_s, k_t, k_ps, k_pt = jax.random.split(key, 4)
    student = jax.random.normal(k_s, (B, C, H, W), jnp.float32)
    teacher = jax.random.normal(k_t, (B, C, H, W), jnp.float32)
    params_s = init_params(k_ps, HW=L, channel=C, node=node)
    params_t = init_params(k_pt, HW=L, channel=C, node=node)

    ref_loss, ref_inter, ref_union = graph_loss_ref(student, teacher, params_s, params_t)

    # 1) Tight check: f32 matmul operands, exact sigmoid denominator.
    loss, inter, union = graph_loss(student, teacher, params_s, params_t,
                                    approx_sigmoid=False, return_stats=True)
    loss = jax.block_until_ready(loss)
    assert loss.shape == ()
    assert jnp.allclose(inter, ref_inter, rtol=1e-4, atol=1e-4), "intersection mismatch"
    assert jnp.allclose(union, ref_union, rtol=1e-4, atol=1e-4), "union mismatch"
    assert jnp.allclose(loss, ref_loss, rtol=1e-4, atol=1e-5), "loss mismatch"

    # 2) Default fast path: EUP approximate reciprocal in the sigmoid.
    loss_fast = jax.block_until_ready(graph_loss(student, teacher, params_s, params_t))
    assert bool(jnp.isfinite(loss_fast))
    assert abs(float(loss_fast) - float(ref_loss)) < 2e-2, "approx-sigmoid loss diverged"

    # 3) bf16 MXU path: x stays f32 in HBM, cast to bf16 inside the kernel (VMEM).
    loss_bf16 = jax.block_until_ready(
        graph_loss(student, teacher, params_s, params_t, compute_dtype=jnp.bfloat16))
    assert bool(jnp.isfinite(loss_bf16))
    assert abs(float(loss_bf16) - float(ref_loss)) < 5e-2, "bf16 loss diverged"

    print("KERNEL_OK")
</pallas_src>

<mosaic_0001>
module attributes {stable_mosaic.version = 11 : i64} {
  func.func @_graph_loss_kernel(%arg0: i32, %arg1: memref<8x256xf32, #tpu.memory_space<vmem>>, %arg2: memref<8x256xf32, #tpu.memory_space<vmem>>, %arg3: memref<256x8xf32, #tpu.memory_space<vmem>>, %arg4: memref<8x8xf32, #tpu.memory_space<vmem>>, %arg5: memref<1x8xf32, #tpu.memory_space<vmem>>, %arg6: memref<8x8xf32, #tpu.memory_space<vmem>>, %arg7: memref<8x1xf32, #tpu.memory_space<vmem>>, %arg8: memref<256x8xf32, #tpu.memory_space<vmem>>, %arg9: memref<8x8xf32, #tpu.memory_space<vmem>>, %arg10: memref<1x8xf32, #tpu.memory_space<vmem>>, %arg11: memref<8x8xf32, #tpu.memory_space<vmem>>, %arg12: memref<8x1xf32, #tpu.memory_space<vmem>>, %arg13: memref<2x8xf32, #tpu.memory_space<vmem>>, %arg14: memref<1x2x1xf32, #tpu.memory_space<vmem>>, %arg15: memref<1x2x1xf32, #tpu.memory_space<vmem>>) attributes {dimension_semantics = [#tpu.dimension_semantics<parallel>], iteration_bounds = array<i64: 1>, scalar_prefetch = 0 : i64, scratch_operands = 0 : i64, tpu.core_type = #tpu.core_type<tc>, window_params = [{transform_indices = @transform_0, window_bounds = array<i64: 8, 256>}, {transform_indices = @transform_1, window_bounds = array<i64: 8, 256>}, {pipeline_mode = #tpu.pipeline_mode<synchronous>, transform_indices = @transform_2, window_bounds = array<i64: 256, 8>}, {pipeline_mode = #tpu.pipeline_mode<synchronous>, transform_indices = @transform_3, window_bounds = array<i64: 8, 8>}, {pipeline_mode = #tpu.pipeline_mode<synchronous>, transform_indices = @transform_4, window_bounds = array<i64: 1, 8>}, {pipeline_mode = #tpu.pipeline_mode<synchronous>, transform_indices = @transform_5, window_bounds = array<i64: 8, 8>}, {pipeline_mode = #tpu.pipeline_mode<synchronous>, transform_indices = @transform_6, window_bounds = array<i64: 8, 1>}, {pipeline_mode = #tpu.pipeline_mode<synchronous>, transform_indices = @transform_7, window_bounds = array<i64: 256, 8>}, {pipeline_mode = #tpu.pipeline_mode<synchronous>, transform_indices = @transform_8, window_bounds = array<i64: 8, 8>}, {pipeline_mode = #tpu.pipeline_mode<synchronous>, transform_indices = @transform_9, window_bounds = array<i64: 1, 8>}, {pipeline_mode = #tpu.pipeline_mode<synchronous>, transform_indices = @transform_10, window_bounds = array<i64: 8, 8>}, {pipeline_mode = #tpu.pipeline_mode<synchronous>, transform_indices = @transform_11, window_bounds = array<i64: 8, 1>}, {pipeline_mode = #tpu.pipeline_mode<synchronous>, transform_indices = @transform_12, window_bounds = array<i64: 2, 8>}, {transform_indices = @transform_13, window_bounds = array<i64: 1, 2, 1>}, {transform_indices = @transform_14, window_bounds = array<i64: 1, 2, 1>}]} {
    %c0 = arith.constant 0 : index
    %c0_0 = arith.constant 0 : index
    %0 = vector.load %arg1[%c0, %c0_0] : memref<8x256xf32, #tpu.memory_space<vmem>>, vector<8x256xf32>
    %c0_1 = arith.constant 0 : index
    %c0_2 = arith.constant 0 : index
    %1 = vector.load %arg3[%c0_1, %c0_2] : memref<256x8xf32, #tpu.memory_space<vmem>>, vector<256x8xf32>
    %cst = arith.constant dense<0.000000e+00> : vector<8x8xf32>
    %2 = tpu.matmul %0, %1, %cst {dimension_numbers = #tpu.dot_dimension_numbers<[1], [0], [0], [1], [0, 0, 1, 1], [], []>} : vector<8x256xf32>, vector<256x8xf32>, vector<8x8xf32> -> vector<8x8xf32>
    %c0_3 = arith.constant 0 : index
    %c0_4 = arith.constant 0 : index
    %3 = vector.load %arg4[%c0_3, %c0_4] : memref<8x8xf32, #tpu.memory_space<vmem>>, vector<8x8xf32>
    %cst_5 = arith.constant dense<0.000000e+00> : vector<8x8xf32>
    %4 = tpu.matmul %2, %3, %cst_5 {dimension_numbers = #tpu.dot_dimension_numbers<[1], [0], [0], [1], [0, 0, 1, 1], [], []>} : vector<8x8xf32>, vector<8x8xf32>, vector<8x8xf32> -> vector<8x8xf32>
    %c0_6 = arith.constant 0 : index
    %c0_7 = arith.constant 0 : index
    %5 = vector.load %arg5[%c0_6, %c0_7] : memref<1x8xf32, #tpu.memory_space<vmem>>, vector<1x8xf32>
    %6 = vector.broadcast %5 : vector<1x8xf32> to vector<8x8xf32>
    %7 = arith.addf %4, %6 : vector<8x8xf32>
    %c0_8 = arith.constant 0 : index
    %c0_9 = arith.constant 0 : index
    %8 = vector.load %arg6[%c0_8, %c0_9] : memref<8x8xf32, #tpu.memory_space<vmem>>, vector<8x8xf32>
    %cst_10 = arith.constant dense<0.000000e+00> : vector<8x8xf32>
    %9 = tpu.matmul %8, %7, %cst_10 {dimension_numbers = #tpu.dot_dimension_numbers<[1], [0], [0], [1], [0, 0, 1, 1], [], []>} : vector<8x8xf32>, vector<8x8xf32>, vector<8x8xf32> -> vector<8x8xf32>
    %c0_11 = arith.constant 0 : index
    %c0_12 = arith.constant 0 : index
    %10 = vector.load %arg7[%c0_11, %c0_12] : memref<8x1xf32, #tpu.memory_space<vmem>>, vector<8x1xf32>
    %11 = vector.broadcast %10 : vector<8x1xf32> to vector<8x8xf32>
    %12 = arith.addf %9, %11 : vector<8x8xf32>
    %cst_13 = arith.constant 0.000000e+00 : f32
    %13 = vector.broadcast %cst_13 : f32 to vector<8x8xf32>
    %14 = arith.maximumf %12, %13 : vector<8x8xf32>
    %cst_14 = arith.constant 0.000000e+00 : f32
    %15 = vector.broadcast %cst_14 : f32 to vector<8x8xf32>
    %16 = arith.subf %15, %14 : vector<8x8xf32>
    %17 = math.exp %16 : vector<8x8xf32>
    %cst_15 = arith.constant 1.000000e+00 : f32
    %18 = vector.broadcast %cst_15 : f32 to vector<8x8xf32>
    %19 = arith.addf %18, %17 : vector<8x8xf32>
    %20 = tpu.reciprocal %19 : vector<8x8xf32> -> vector<8x8xf32>
    %c0_16 = arith.constant 0 : index
    %c0_17 = arith.constant 0 : index
    %21 = vector.load %arg2[%c0_16, %c0_17] : memref<8x256xf32, #tpu.memory_space<vmem>>, vector<8x256xf32>
    %c0_18 = arith.constant 0 : index
    %c0_19 = arith.constant 0 : index
    %22 = vector.load %arg8[%c0_18, %c0_19] : memref<256x8xf32, #tpu.memory_space<vmem>>, vector<256x8xf32>
    %cst_20 = arith.constant dense<0.000000e+00> : vector<8x8xf32>
    %23 = tpu.matmul %21, %22, %cst_20 {dimension_numbers = #tpu.dot_dimension_numbers<[1], [0], [0], [1], [0, 0, 1, 1], [], []>} : vector<8x256xf32>, vector<256x8xf32>, vector<8x8xf32> -> vector<8x8xf32>
    %c0_21 = arith.constant 0 : index
    %c0_22 = arith.constant 0 : index
    %24 = vector.load %arg9[%c0_21, %c0_22] : memref<8x8xf32, #tpu.memory_space<vmem>>, vector<8x8xf32>
    %cst_23 = arith.constant dense<0.000000e+00> : vector<8x8xf32>
    %25 = tpu.matmul %23, %24, %cst_23 {dimension_numbers = #tpu.dot_dimension_numbers<[1], [0], [0], [1], [0, 0, 1, 1], [], []>} : vector<8x8xf32>, vector<8x8xf32>, vector<8x8xf32> -> vector<8x8xf32>
    %c0_24 = arith.constant 0 : index
    %c0_25 = arith.constant 0 : index
    %26 = vector.load %arg10[%c0_24, %c0_25] : memref<1x8xf32, #tpu.memory_space<vmem>>, vector<1x8xf32>
    %27 = vector.broadcast %26 : vector<1x8xf32> to vector<8x8xf32>
    %28 = arith.addf %25, %27 : vector<8x8xf32>
    %c0_26 = arith.constant 0 : index
    %c0_27 = arith.constant 0 : index
    %29 = vector.load %arg11[%c0_26, %c0_27] : memref<8x8xf32, #tpu.memory_space<vmem>>, vector<8x8xf32>
    %cst_28 = arith.constant dense<0.000000e+00> : vector<8x8xf32>
    %30 = tpu.matmul %29, %28, %cst_28 {dimension_numbers = #tpu.dot_dimension_numbers<[1], [0], [0], [1], [0, 0, 1, 1], [], []>} : vector<8x8xf32>, vector<8x8xf32>, vector<8x8xf32> -> vector<8x8xf32>
    %c0_29 = arith.constant 0 : index
    %c0_30 = arith.constant 0 : index
    %31 = vector.load %arg12[%c0_29, %c0_30] : memref<8x1xf32, #tpu.memory_space<vmem>>, vector<8x1xf32>
    %32 = vector.broadcast %31 : vector<8x1xf32> to vector<8x8xf32>
    %33 = arith.addf %30, %32 : vector<8x8xf32>
    %cst_31 = arith.constant 0.000000e+00 : f32
    %34 = vector.broadcast %cst_31 : f32 to vector<8x8xf32>
    %35 = arith.maximumf %33, %34 : vector<8x8xf32>
    %cst_32 = arith.constant 0.000000e+00 : f32
    %36 = vector.broadcast %cst_32 : f32 to vector<8x8xf32>
    %37 = arith.subf %36, %35 : vector<8x8xf32>
    %38 = math.exp %37 : vector<8x8xf32>
    %cst_33 = arith.constant 1.000000e+00 : f32
    %39 = vector.broadcast %cst_33 : f32 to vector<8x8xf32>
    %40 = arith.addf %39, %38 : vector<8x8xf32>
    %41 = tpu.reciprocal %40 : vector<8x8xf32> -> vector<8x8xf32>
    %c0_34 = arith.constant 0 : index
    %c0_35 = arith.constant 0 : index
    %42 = vector.load %arg13[%c0_34, %c0_35] : memref<2x8xf32, #tpu.memory_space<vmem>>, vector<2x8xf32>
    %43 = arith.mulf %20, %41 : vector<8x8xf32>
    %cst_36 = arith.constant dense<0.000000e+00> : vector<2x8xf32>
    %44 = tpu.matmul %42, %43, %cst_36 {dimension_numbers = #tpu.dot_dimension_numbers<[1], [0], [0], [1], [0, 0, 1, 1], [], []>} : vector<2x8xf32>, vector<8x8xf32>, vector<2x8xf32> -> vector<2x8xf32>
    %cst_37 = arith.constant dense<0.000000e+00> : vector<2x8xf32>
    %45 = tpu.matmul %42, %20, %cst_37 {dimension_numbers = #tpu.dot_dimension_numbers<[1], [0], [0], [1], [0, 0, 1, 1], [], []>} : vector<2x8xf32>, vector<8x8xf32>, vector<2x8xf32> -> vector<2x8xf32>
    %cst_38 = arith.constant dense<0.000000e+00> : vector<2x8xf32>
    %46 = tpu.matmul %42, %41, %cst_38 {dimension_numbers = #tpu.dot_dimension_numbers<[1], [0], [0], [1], [0, 0, 1, 1], [], []>} : vector<2x8xf32>, vector<8x8xf32>, vector<2x8xf32> -> vector<2x8xf32>
    %cst_39 = arith.constant dense<0.000000e+00> : vector<2xf32>
    %47 = vector.multi_reduction <add>, %44, %cst_39 [1] : vector<2x8xf32> to vector<2xf32>
    %48 = vector.shape_cast %47 : vector<2xf32> to vector<2x1xf32>
    %c0_40 = arith.constant 0 : index
    %c0_41 = arith.constant 0 : index
    %c0_42 = arith.constant 0 : index
    %49 = vector.load %arg14[%c0_40, %c0_41, %c0_42] : memref<1x2x1xf32, #tpu.memory_space<vmem>>, vector<1x2x1xf32>
    %50 = vector.shape_cast %49 : vector<1x2x1xf32> to vector<2x1xf32>
    %51 = vector.shape_cast %48 : vector<2x1xf32> to vector<1x2x1xf32>
    tpu.vector_store %arg14[%c0_40, %c0_41, %c0_42], %51 {strides = array<i32>} : memref<1x2x1xf32, #tpu.memory_space<vmem>>, vector<1x2x1xf32>,
    %cst_43 = arith.constant dense<0.000000e+00> : vector<2xf32>
    %52 = vector.multi_reduction <add>, %45, %cst_43 [1] : vector<2x8xf32> to vector<2xf32>
    %53 = vector.shape_cast %52 : vector<2xf32> to vector<2x1xf32>
    %cst_44 = arith.constant dense<0.000000e+00> : vector<2xf32>
    %54 = vector.multi_reduction <add>, %46, %cst_44 [1] : vector<2x8xf32> to vector<2xf32>
    %55 = vector.shape_cast %54 : vector<2xf32> to vector<2x1xf32>
    %56 = arith.addf %53, %55 : vector<2x1xf32>
    %c0_45 = arith.constant 0 : index
    %c0_46 = arith.constant 0 : index
    %c0_47 = arith.constant 0 : index
    %57 = vector.load %arg15[%c0_45, %c0_46, %c0_47] : memref<1x2x1xf32, #tpu.memory_space<vmem>>, vector<1x2x1xf32>
    %58 = vector.shape_cast %57 : vector<1x2x1xf32> to vector<2x1xf32>
    %59 = vector.shape_cast %56 : vector<2x1xf32> to vector<1x2x1xf32>
    tpu.vector_store %arg15[%c0_45, %c0_46, %c0_47], %59 {strides = array<i32>} : memref<1x2x1xf32, #tpu.memory_space<vmem>>, vector<1x2x1xf32>,
    return
  }
  func.func @transform_0(%arg0: i32) -> (i32, i32) {
    %c0_i32 = arith.constant 0 : i32
    %c0_i32_0 = arith.constant 0 : i32
    return %arg0, %c0_i32 : i32, i32
  }
  func.func @transform_1(%arg0: i32) -> (i32, i32) {
    %c0_i32 = arith.constant 0 : i32
    %c0_i32_0 = arith.constant 0 : i32
    return %arg0, %c0_i32 : i32, i32
  }
  func.func @transform_2(%arg0: i32) -> (i32, i32) {
    %c0_i32 = arith.constant 0 : i32
    %c0_i32_0 = arith.constant 0 : i32
    %c0_i32_1 = arith.constant 0 : i32
    return %c0_i32, %c0_i32_0 : i32, i32
  }
  func.func @transform_3(%arg0: i32) -> (i32, i32) {
    %c0_i32 = arith.constant 0 : i32
    %c0_i32_0 = arith.constant 0 : i32
    %c0_i32_1 = arith.constant 0 : i32
    return %c0_i32, %c0_i32_0 : i32, i32
  }
  func.func @transform_4(%arg0: i32) -> (i32, i32) {
    %c0_i32 = arith.constant 0 : i32
    %c0_i32_0 = arith.constant 0 : i32
    %c0_i32_1 = arith.constant 0 : i32
    return %c0_i32, %c0_i32_0 : i32, i32
  }
  func.func @transform_5(%arg0: i32) -> (i32, i32) {
    %c0_i32 = arith.constant 0 : i32
    %c0_i32_0 = arith.constant 0 : i32
    %c0_i32_1 = arith.constant 0 : i32
    return %c0_i32, %c0_i32_0 : i32, i32
  }
  func.func @transform_6(%arg0: i32) -> (i32, i32) {
    %c0_i32 = arith.constant 0 : i32
    %c0_i32_0 = arith.constant 0 : i32
    %c0_i32_1 = arith.constant 0 : i32
    return %c0_i32, %c0_i32_0 : i32, i32
  }
  func.func @transform_7(%arg0: i32) -> (i32, i32) {
    %c0_i32 = arith.constant 0 : i32
    %c0_i32_0 = arith.constant 0 : i32
    %c0_i32_1 = arith.constant 0 : i32
    return %c0_i32, %c0_i32_0 : i32, i32
  }
  func.func @transform_8(%arg0: i32) -> (i32, i32) {
    %c0_i32 = arith.constant 0 : i32
    %c0_i32_0 = arith.constant 0 : i32
    %c0_i32_1 = arith.constant 0 : i32
    return %c0_i32, %c0_i32_0 : i32, i32
  }
  func.func @transform_9(%arg0: i32) -> (i32, i32) {
    %c0_i32 = arith.constant 0 : i32
    %c0_i32_0 = arith.constant 0 : i32
    %c0_i32_1 = arith.constant 0 : i32
    return %c0_i32, %c0_i32_0 : i32, i32
  }
  func.func @transform_10(%arg0: i32) -> (i32, i32) {
    %c0_i32 = arith.constant 0 : i32
    %c0_i32_0 = arith.constant 0 : i32
    %c0_i32_1 = arith.constant 0 : i32
    return %c0_i32, %c0_i32_0 : i32, i32
  }
  func.func @transform_11(%arg0: i32) -> (i32, i32) {
    %c0_i32 = arith.constant 0 : i32
    %c0_i32_0 = arith.constant 0 : i32
    %c0_i32_1 = arith.constant 0 : i32
    return %c0_i32, %c0_i32_0 : i32, i32
  }
  func.func @transform_12(%arg0: i32) -> (i32, i32) {
    %c0_i32 = arith.constant 0 : i32
    %c0_i32_0 = arith.constant 0 : i32
    %c0_i32_1 = arith.constant 0 : i32
    return %c0_i32, %c0_i32_0 : i32, i32
  }
  func.func @transform_13(%arg0: i32) -> (i32, i32, i32) {
    %c0_i32 = arith.constant 0 : i32
    %c0_i32_0 = arith.constant 0 : i32
    %c0_i32_1 = arith.constant 0 : i32
    return %arg0, %c0_i32, %c0_i32_0 : i32, i32, i32
  }
  func.func @transform_14(%arg0: i32) -> (i32, i32, i32) {
    %c0_i32 = arith.constant 0 : i32
    %c0_i32_0 = arith.constant 0 : i32
    %c0_i32_1 = arith.constant 0 : i32
    return %arg0, %c0_i32, %c0_i32_0 : i32, i32, i32
  }
}

</mosaic_0001>

<llo_original>
// kernel: tpu_custom_call.1
$region0: #{tpu_custom_call.1}
  #allocation0 [shape = 'u32[]', space=smem, size = 0x4, offset = 0x4, fixed_abs, tag = 'smem constant byte address 0x4 - core index']
  #allocation1 [shape = 'u32[144,128]{1,0:T(1,128)}', space=vmem, size = 0x12000, scoped, tag = 'internal scratch']
  %s0 = inlined_call_operand.vmem [shape: f32[8,256], index: 0, kind: input, shape index: {}]
  %s1 = inlined_call_operand.vmem [shape: f32[8,256], index: 1, kind: input, shape index: {}]
  %s2 = inlined_call_operand.vmem [shape: f32[256,8], index: 2, kind: input, shape index: {}]
  %s3 = inlined_call_operand.vmem [shape: f32[8,8], index: 3, kind: input, shape index: {}]
  %s4 = inlined_call_operand.vmem [shape: f32[1,8], index: 4, kind: input, shape index: {}]
  %s5 = inlined_call_operand.vmem [shape: f32[8,8], index: 5, kind: input, shape index: {}]
  %s6 = inlined_call_operand.vmem [shape: f32[8,1], index: 6, kind: input, shape index: {}]
  %s7 = inlined_call_operand.vmem [shape: f32[256,8], index: 7, kind: input, shape index: {}]
  %s8 = inlined_call_operand.vmem [shape: f32[8,8], index: 8, kind: input, shape index: {}]
  %s9 = inlined_call_operand.vmem [shape: f32[1,8], index: 9, kind: input, shape index: {}]
  %s10 = inlined_call_operand.vmem [shape: f32[8,8], index: 10, kind: input, shape index: {}]
  %s11 = inlined_call_operand.vmem [shape: f32[8,1], index: 11, kind: input, shape index: {}]
  %s12 = inlined_call_operand.vmem [shape: f32[2,8], index: 12, kind: input, shape index: {}]
  %s13 = inlined_call_operand.vmem [shape: f32[1,2,1], index: 13, kind: output, shape index: {0}]
  %s14 = inlined_call_operand.vmem [shape: f32[1,2,1], index: 14, kind: output, shape index: {1}]
  %15 = xla_tuple %s13, %s14
  %s16 = sld [smem:[#allocation0]]
  $region70: #{tpu_custom_call.1} parent=0
    _
  %s18 = ssub.s32 1, %s16
  %s19 = scalar_select 0, %s18, %s16
  // Predicated region
  $region2: #{tpu_custom_call.1} parent=0 // pred_check
    _
  $region3: #{tpu_custom_call.1} parent=0 // pred_check_branch
    %21 = sbr.rel (0) target = $region5
  $region4: #{tpu_custom_call.1} parent=0 // pred_region
    _
  $region5: #{tpu_custom_call.1} parent=0 // pred_fallthru
    _
  // Predicated region
  $region6: #{tpu_custom_call.1} parent=0 // pred_check
    _
  $region7: #{tpu_custom_call.1} parent=0 // pred_check_branch
    %23 = sbr.rel (0) target = $region9
  $region8: #{tpu_custom_call.1} parent=0 // pred_region
    _
  $region9: #{tpu_custom_call.1} parent=0 // pred_fallthru
    _
  // Predicated region
  $region10: #{tpu_custom_call.1} parent=0 // pred_check
    _
  $region11: #{tpu_custom_call.1} parent=0 // pred_check_branch
    %25 = sbr.rel (0) target = $region13
  $region12: #{tpu_custom_call.1} parent=0 // pred_region
    _
  $region13: #{tpu_custom_call.1} parent=0 // pred_fallthru
    _
  // Predicated region
  $region14: #{tpu_custom_call.1} parent=0 // pred_check
    _
  $region15: #{tpu_custom_call.1} parent=0 // pred_check_branch
    %27 = sbr.rel (0) target = $region17
  $region16: #{tpu_custom_call.1} parent=0 // pred_region
    _
  $region17: #{tpu_custom_call.1} parent=0 // pred_fallthru
    _
  // Predicated region
  $region18: #{tpu_custom_call.1} parent=0 // pred_check
    _
  $region19: #{tpu_custom_call.1} parent=0 // pred_check_branch
    %29 = sbr.rel (0) target = $region21
  $region20: #{tpu_custom_call.1} parent=0 // pred_region
    _
  $region21: #{tpu_custom_call.1} parent=0 // pred_fallthru
    _
  // Predicated region
  $region22: #{tpu_custom_call.1} parent=0 // pred_check
    _
  $region23: #{tpu_custom_call.1} parent=0 // pred_check_branch
    %31 = sbr.rel (0) target = $region25
  $region24: #{tpu_custom_call.1} parent=0 // pred_region
    _
  $region25: #{tpu_custom_call.1} parent=0 // pred_fallthru
    _
  // Predicated region
  $region26: #{tpu_custom_call.1} parent=0 // pred_check
    _
  $region27: #{tpu_custom_call.1} parent=0 // pred_check_branch
    %33 = sbr.rel (0) target = $region29
  $region28: #{tpu_custom_call.1} parent=0 // pred_region
    _
  $region29: #{tpu_custom_call.1} parent=0 // pred_fallthru
    _
  // Predicated region
  $region30: #{tpu_custom_call.1} parent=0 // pred_check
    _
  $region31: #{tpu_custom_call.1} parent=0 // pred_check_branch
    %35 = sbr.rel (0) target = $region33
  $region32: #{tpu_custom_call.1} parent=0 // pred_region
    _
  $region33: #{tpu_custom_call.1} parent=0 // pred_fallthru
    _
  // Predicated region
  $region34: #{tpu_custom_call.1} parent=0 // pred_check
    _
  $region35: #{tpu_custom_call.1} parent=0 // pred_check_branch
    %37 = sbr.rel (0) target = $region37
  $region36: #{tpu_custom_call.1} parent=0 // pred_region
    _
  $region37: #{tpu_custom_call.1} parent=0 // pred_fallthru
    _
  // Predicated region
  $region38: #{tpu_custom_call.1} parent=0 // pred_check
    _
  $region39: #{tpu_custom_call.1} parent=0 // pred_check_branch
    %39 = sbr.rel (0) target = $region41
  $region40: #{tpu_custom_call.1} parent=0 // pred_region
    _
  $region41: #{tpu_custom_call.1} parent=0 // pred_fallthru
    _
  // Predicated region
  $region42: #{tpu_custom_call.1} parent=0 // pred_check
    _
  $region43: #{tpu_custom_call.1} parent=0 // pred_check_branch
    %41 = sbr.rel (0) target = $region45
  $region44: #{tpu_custom_call.1} parent=0 // pred_region
    _
  $region45: #{tpu_custom_call.1} parent=0 // pred_fallthru
    _
  // Predicated region
  $region46: #{tpu_custom_call.1} parent=0 // pred_check
    _
  $region47: #{tpu_custom_call.1} parent=0 // pred_check_branch
    %43 = sbr.rel (0) target = $region49
  $region48: #{tpu_custom_call.1} parent=0 // pred_region
    _
  $region49: #{tpu_custom_call.1} parent=0 // pred_fallthru
    _
  // Predicated region
  $region50: #{tpu_custom_call.1} parent=0 // pred_check
    _
  $region51: #{tpu_custom_call.1} parent=0 // pred_check_branch
    %45 = sbr.rel (0) target = $region53
  $region52: #{tpu_custom_call.1} parent=0 // pred_region
    _
  $region53: #{tpu_custom_call.1} parent=0 // pred_fallthru
    _
  %v46 = vld [vmem:[%s0] sm:$0xff]
  %v47 = vld [vmem:[%s0 + $0x8] sm:$0xff]
  %v48 = vld [vmem:[%s2] sm:$0xff]
  %v49 = vld [vmem:[%s2 + $0x8] sm:$0xff]
  %v50 = vld [vmem:[%s2 + $0x10] sm:$0xff]
  %v51 = vld [vmem:[%s2 + $0x18] sm:$0xff]
  %v52 = vld [vmem:[%s2 + $0x20] sm:$0xff]
  %v53 = vld [vmem:[%s2 + $0x28] sm:$0xff]
  %v54 = vld [vmem:[%s2 + $0x30] sm:$0xff]
  %v55 = vld [vmem:[%s2 + $0x38] sm:$0xff]
  %v56 = vld [vmem:[%s2 + $0x40] sm:$0xff]
  %v57 = vld [vmem:[%s2 + $0x48] sm:$0xff]
  %v58 = vld [vmem:[%s2 + $0x50] sm:$0xff]
  %v59 = vld [vmem:[%s2 + $0x58] sm:$0xff]
  %v60 = vld [vmem:[%s2 + $0x60] sm:$0xff]
  %v61 = vld [vmem:[%s2 + $0x68] sm:$0xff]
  %v62 = vld [vmem:[%s2 + $0x70] sm:$0xff]
  %v63 = vld [vmem:[%s2 + $0x78] sm:$0xff]
  %v64 = vld [vmem:[%s2 + $0x80] sm:$0xff]
  %v65 = vld [vmem:[%s2 + $0x88] sm:$0xff]
  %v66 = vld [vmem:[%s2 + $0x90] sm:$0xff]
  %v67 = vld [vmem:[%s2 + $0x98] sm:$0xff]
  %v68 = vld [vmem:[%s2 + $0xa0] sm:$0xff]
  %v69 = vld [vmem:[%s2 + $0xa8] sm:$0xff]
  %v70 = vld [vmem:[%s2 + $0xb0] sm:$0xff]
  %v71 = vld [vmem:[%s2 + $0xb8] sm:$0xff]
  %v72 = vld [vmem:[%s2 + $0xc0] sm:$0xff]
  %v73 = vld [vmem:[%s2 + $0xc8] sm:$0xff]
  %v74 = vld [vmem:[%s2 + $0xd0] sm:$0xff]
  %v75 = vld [vmem:[%s2 + $0xd8] sm:$0xff]
  %v76 = vld [vmem:[%s2 + $0xe0] sm:$0xff]
  %v77 = vld [vmem:[%s2 + $0xe8] sm:$0xff]
  %v78 = vld [vmem:[%s2 + $0xf0] sm:$0xff]
  %v79 = vld [vmem:[%s2 + $0xf8] sm:$0xff]
  %80 = vmatprep.subr.mxu0 0.0
  %81 = vmatpush1.msra.mxu0 %v63
  %82 = vmatprep.subr.mxu0 0.0
  %83 = vmatpush1.msra.mxu0 %v62
  %84 = vmatprep.subr.mxu0 0.0
  %85 = vmatpush1.msra.mxu0 %v61
  %86 = vmatprep.subr.mxu0 0.0
  %87 = vmatpush1.msra.mxu0 %v60
  %88 = vmatprep.subr.mxu0 0.0
  %89 = vmatpush1.msra.mxu0 %v59
  %90 = vmatprep.subr.mxu0 0.0
  %91 = vmatpush1.msra.mxu0 %v58
  %92 = vmatprep.subr.mxu0 0.0
  %93 = vmatpush1.msra.mxu0 %v57
  %94 = vmatprep.subr.mxu0 0.0
  %95 = vmatpush1.msra.mxu0 %v56
  %96 = vmatprep.subr.mxu0 0.0
  %97 = vmatpush1.msra.mxu0 %v55
  %98 = vmatprep.subr.mxu0 0.0
  %99 = vmatpush1.msra.mxu0 %v54
  %100 = vmatprep.subr.mxu0 0.0
  %101 = vmatpush1.msra.mxu0 %v53
  %102 = vmatprep.subr.mxu0 0.0
  %103 = vmatpush1.msra.mxu0 %v52
  %104 = vmatprep.subr.mxu0 0.0
  %105 = vmatpush1.msra.mxu0 %v51
  %106 = vmatprep.subr.mxu0 0.0
  %107 = vmatpush1.msra.mxu0 %v50
  %108 = vmatprep.subr.mxu0 0.0
  %109 = vmatpush1.msra.mxu0 %v49
  %110 = vmatprep.subr.mxu0 0.0
  %111 = vmatpush1.msra.mxu0 %v48
  %112 = vmatprep.subr.mxu0 0.0
  %113 = vmatpush2.msra.mxu0 %v79
  %114 = vmatprep.subr.mxu0 0.0
  %115 = vmatpush2.msra.mxu0 %v78
  %116 = vmatprep.subr.mxu0 0.0
  %117 = vmatpush2.msra.mxu0 %v77
  %118 = vmatprep.subr.mxu0 0.0
  %119 = vmatpush2.msra.mxu0 %v76
  %120 = vmatprep.subr.mxu0 0.0
  %121 = vmatpush2.msra.mxu0 %v75
  %122 = vmatprep.subr.mxu0 0.0
  %123 = vmatpush2.msra.mxu0 %v74
  %124 = vmatprep.subr.mxu0 0.0
  %125 = vmatpush2.msra.mxu0 %v73
  %126 = vmatprep.subr.mxu0 0.0
  %127 = vmatpush2.msra.mxu0 %v72
  %128 = vmatprep.subr.mxu0 0.0
  %129 = vmatpush2.msra.mxu0 %v71
  %130 = vmatprep.subr.mxu0 0.0
  %131 = vmatpush2.msra.mxu0 %v70
  %132 = vmatprep.subr.mxu0 0.0
  %133 = vmatpush2.msra.mxu0 %v69
  %134 = vmatprep.subr.mxu0 0.0
  %135 = vmatpush2.msra.mxu0 %v68
  %136 = vmatprep.subr.mxu0 0.0
  %137 = vmatpush2.msra.mxu0 %v67
  %138 = vmatprep.subr.mxu0 0.0
  %139 = vmatpush2.msra.mxu0 %v66
  %140 = vmatprep.subr.mxu0 0.0
  %141 = vmatpush2.msra.mxu0 %v65
  %142 = vmatprep.subr.mxu0 0.0
  %143 = vmatpush2.msra.mxu0 %v64
  %144 = vmatprep.mubr.f32.mxu0 %v47
  %145 = vmatmul.mubr.f32.gmra.mxu0 %v46
  %v146 = vpop.f32.mrf.mxu0
  %v147 = vadd.f32 0.0, %v146
  %v148 = vpop.f32.mrf.mxu0
  %149 = vdwg.mxu0
  %v150 = vld [vmem:[%s3] sm:$0xff]
  %v151 = vld [vmem:[%s4] sm:$0x1]
  %v153 = vlaneseq
  %v154 = vshrl.u32 %v153, 7
  %v155 = vsub.s32 0, %v154
  %v156 = vrot.slane %v151, %v155
  %vm158 = vcmask 64512
  %v160 = vsel %vm158, %v147, 0
  %162 = vmatprep.subr.mxu0 0.0
  %163 = vmatpush1.msra.mxu0 0.0
  %164 = vmatprep.subr.mxu0 0.0
  %165 = vmatpush1.msra.mxu0 0.0
  %166 = vmatprep.subr.mxu0 0.0
  %167 = vmatpush1.msra.mxu0 0.0
  %168 = vmatprep.subr.mxu0 0.0
  %169 = vmatpush1.msra.mxu0 0.0
  %170 = vmatprep.subr.mxu0 0.0
  %171 = vmatpush1.msra.mxu0 0.0
  %172 = vmatprep.subr.mxu0 0.0
  %173 = vmatpush1.msra.mxu0 0.0
  %174 = vmatprep.subr.mxu0 0.0
  %175 = vmatpush1.msra.mxu0 0.0
  %176 = vmatprep.subr.mxu0 0.0
  %177 = vmatpush1.msra.mxu0 0.0
  %178 = vmatprep.subr.mxu0 0.0
  %179 = vmatpush1.msra.mxu0 0.0
  %180 = vmatprep.subr.mxu0 0.0
  %181 = vmatpush1.msra.mxu0 0.0
  %182 = vmatprep.subr.mxu0 0.0
  %183 = vmatpush1.msra.mxu0 0.0
  %184 = vmatprep.subr.mxu0 0.0
  %185 = vmatpush1.msra.mxu0 0.0
  %186 = vmatprep.subr.mxu0 0.0
  %187 = vmatpush1.msra.mxu0 0.0
  %188 = vmatprep.subr.mxu0 0.0
  %189 = vmatpush1.msra.mxu0 0.0
  %190 = vmatprep.subr.mxu0 0.0
  %191 = vmatpush1.msra.mxu0 0.0
  %192 = vmatprep.subr.mxu0 0.0
  %193 = vmatpush1.msra.mxu0 %v150
  %194 = vmatprep.subr.mxu0 0.0
  %195 = vmatpush2.msra.mxu0 0.0
  %196 = vmatprep.subr.mxu0 0.0
  %197 = vmatpush2.msra.mxu0 0.0
  %198 = vmatprep.subr.mxu0 0.0
  %199 = vmatpush2.msra.mxu0 0.0
  %200 = vmatprep.subr.mxu0 0.0
  %201 = vmatpush2.msra.mxu0 0.0
  %202 = vmatprep.subr.mxu0 0.0
  %203 = vmatpush2.msra.mxu0 0.0
  %204 = vmatprep.subr.mxu0 0.0
  %205 = vmatpush2.msra.mxu0 0.0
  %206 = vmatprep.subr.mxu0 0.0
  %207 = vmatpush2.msra.mxu0 0.0
  %208 = vmatprep.subr.mxu0 0.0
  %209 = vmatpush2.msra.mxu0 0.0
  %210 = vmatprep.subr.mxu0 0.0
  %211 = vmatpush2.msra.mxu0 0.0
  %212 = vmatprep.subr.mxu0 0.0
  %213 = vmatpush2.msra.mxu0 0.0
  %214 = vmatprep.subr.mxu0 0.0
  %215 = vmatpush2.msra.mxu0 0.0
  %216 = vmatprep.subr.mxu0 0.0
  %217 = vmatpush2.msra.mxu0 0.0
  %218 = vmatprep.subr.mxu0 0.0
  %219 = vmatpush2.msra.mxu0 0.0
  %220 = vmatprep.subr.mxu0 0.0
  %221 = vmatpush2.msra.mxu0 0.0
  %222 = vmatprep.subr.mxu0 0.0
  %223 = vmatpush2.msra.mxu0 0.0
  %224 = vmatprep.subr.mxu0 0.0
  %225 = vmatpush2.msra.mxu0 0.0
  %226 = vmatprep.mubr.f32.mxu0 0.0
  %227 = vmatmul.mubr.f32.gmra.mxu0 %v160
  %v228 = vpop.f32.mrf.mxu0
  %v229 = vadd.f32 %v156, %v228
  %v230 = vpop.f32.mrf.mxu0
  %231 = vdwg.mxu0
  %v232 = vld [vmem:[%s5] sm:$0xff]
  %v233 = vld [vmem:[%s6] sm:$0xff]
  %235 = vset.pattern.permute.xlu0 0
  %236 = vperm.xlu0 %235, %v233
  %v237 = vpop.permute.xlu0 %236
  %v240 = vsel %vm158, %v232, 0
  %242 = vmatprep.subr.mxu0 0.0
  %243 = vmatpush1.msra.mxu0 0.0
  %244 = vmatprep.subr.mxu0 0.0
  %245 = vmatpush1.msra.mxu0 0.0
  %246 = vmatprep.subr.mxu0 0.0
  %247 = vmatpush1.msra.mxu0 0.0
  %248 = vmatprep.subr.mxu0 0.0
  %249 = vmatpush1.msra.mxu0 0.0
  %250 = vmatprep.subr.mxu0 0.0
  %251 = vmatpush1.msra.mxu0 0.0
  %252 = vmatprep.subr.mxu0 0.0
  %253 = vmatpush1.msra.mxu0 0.0
  %254 = vmatprep.subr.mxu0 0.0
  %255 = vmatpush1.msra.mxu0 0.0
  %256 = vmatprep.subr.mxu0 0.0
  %257 = vmatpush1.msra.mxu0 0.0
  %258 = vmatprep.subr.mxu0 0.0
  %259 = vmatpush1.msra.mxu0 0.0
  %260 = vmatprep.subr.mxu0 0.0
  %261 = vmatpush1.msra.mxu0 0.0
  %262 = vmatprep.subr.mxu0 0.0
  %263 = vmatpush1.msra.mxu0 0.0
  %264 = vmatprep.subr.mxu0 0.0
  %265 = vmatpush1.msra.mxu0 0.0
  %266 = vmatprep.subr.mxu0 0.0
  %267 = vmatpush1.msra.mxu0 0.0
  %268 = vmatprep.subr.mxu0 0.0
  %269 = vmatpush1.msra.mxu0 0.0
  %270 = vmatprep.subr.mxu0 0.0
  %271 = vmatpush1.msra.mxu0 0.0
  %272 = vmatprep.subr.mxu0 0.0
  %273 = vmatpush1.msra.mxu0 %v229
  %274 = vmatprep.subr.mxu0 0.0
  %275 = vmatpush2.msra.mxu0 0.0
  %276 = vmatprep.subr.mxu0 0.0
  %277 = vmatpush2.msra.mxu0 0.0
  %278 = vmatprep.subr.mxu0 0.0
  %279 = vmatpush2.msra.mxu0 0.0
  %280 = vmatprep.subr.mxu0 0.0
  %281 = vmatpush2.msra.mxu0 0.0
  %282 = vmatprep.subr.mxu0 0.0
  %283 = vmatpush2.msra.mxu0 0.0
  %284 = vmatprep.subr.mxu0 0.0
  %285 = vmatpush2.msra.mxu0 0.0
  %286 = vmatprep.subr.mxu0 0.0
  %287 = vmatpush2.msra.mxu0 0.0
  %288 = vmatprep.subr.mxu0 0.0
  %289 = vmatpush2.msra.mxu0 0.0
  %290 = vmatprep.subr.mxu0 0.0
  %291 = vmatpush2.msra.mxu0 0.0
  %292 = vmatprep.subr.mxu0 0.0
  %293 = vmatpush2.msra.mxu0 0.0
  %294 = vmatprep.subr.mxu0 0.0
  %295 = vmatpush2.msra.mxu0 0.0
  %296 = vmatprep.subr.mxu0 0.0
  %297 = vmatpush2.msra.mxu0 0.0
  %298 = vmatprep.subr.mxu0 0.0
  %299 = vmatpush2.msra.mxu0 0.0
  %300 = vmatprep.subr.mxu0 0.0
  %301 = vmatpush2.msra.mxu0 0.0
  %302 = vmatprep.subr.mxu0 0.0
  %303 = vmatpush2.msra.mxu0 0.0
  %304 = vmatprep.subr.mxu0 0.0
  %305 = vmatpush2.msra.mxu0 0.0
  %306 = vmatprep.mubr.f32.mxu0 0.0
  %307 = vmatmul.mubr.f32.gmra.mxu0 %v240
  %v308 = vpop.f32.mrf.mxu0
  %v309 = vadd.f32 %v237, %v308
  %v310 = vpop.f32.mrf.mxu0
  %311 = vdwg.mxu0
  %v312 = vmax.f32 %v309, 0.0
  %v313 = vsub.f32 0.0, %v312
  %v314 = vmul.f32 %v313, 1.442695
  %v315 = vpow.pop %v314
  %v316 = vadd.f32 %v315, 1.0
  %v317 = vrcp.pop %v316
  %v318 = vld [vmem:[%s1] sm:$0xff]
  %v319 = vld [vmem:[%s1 + $0x8] sm:$0xff]
  %v320 = vld [vmem:[%s7] sm:$0xff]
  %v321 = vld [vmem:[%s7 + $0x8] sm:$0xff]
  %v322 = vld [vmem:[%s7 + $0x10] sm:$0xff]
  %v323 = vld [vmem:[%s7 + $0x18] sm:$0xff]
  %v324 = vld [vmem:[%s7 + $0x20] sm:$0xff]
  %v325 = vld [vmem:[%s7 + $0x28] sm:$0xff]
  %v326 = vld [vmem:[%s7 + $0x30] sm:$0xff]
  %v327 = vld [vmem:[%s7 + $0x38] sm:$0xff]
  %v328 = vld [vmem:[%s7 + $0x40] sm:$0xff]
  %v329 = vld [vmem:[%s7 + $0x48] sm:$0xff]
  %v330 = vld [vmem:[%s7 + $0x50] sm:$0xff]
  %v331 = vld [vmem:[%s7 + $0x58] sm:$0xff]
  %v332 = vld [vmem:[%s7 + $0x60] sm:$0xff]
  %v333 = vld [vmem:[%s7 + $0x68] sm:$0xff]
  %v334 = vld [vmem:[%s7 + $0x70] sm:$0xff]
  %v335 = vld [vmem:[%s7 + $0x78] sm:$0xff]
  %v336 = vld [vmem:[%s7 + $0x80] sm:$0xff]
  %v337 = vld [vmem:[%s7 + $0x88] sm:$0xff]
  %v338 = vld [vmem:[%s7 + $0x90] sm:$0xff]
  %v339 = vld [vmem:[%s7 + $0x98] sm:$0xff]
  %v340 = vld [vmem:[%s7 + $0xa0] sm:$0xff]
  %v341 = vld [vmem:[%s7 + $0xa8] sm:$0xff]
  %v342 = vld [vmem:[%s7 + $0xb0] sm:$0xff]
  %v343 = vld [vmem:[%s7 + $0xb8] sm:$0xff]
  %v344 = vld [vmem:[%s7 + $0xc0] sm:$0xff]
  %v345 = vld [vmem:[%s7 + $0xc8] sm:$0xff]
  %v346 = vld [vmem:[%s7 + $0xd0] sm:$0xff]
  %v347 = vld [vmem:[%s7 + $0xd8] sm:$0xff]
  %v348 = vld [vmem:[%s7 + $0xe0] sm:$0xff]
  %v349 = vld [vmem:[%s7 + $0xe8] sm:$0xff]
  %v350 = vld [vmem:[%s7 + $0xf0] sm:$0xff]
  %v351 = vld [vmem:[%s7 + $0xf8] sm:$0xff]
  %352 = vmatprep.subr.mxu0 0.0
  %353 = vmatpush1.msra.mxu0 %v335
  %354 = vmatprep.subr.mxu0 0.0
  %355 = vmatpush1.msra.mxu0 %v334
  %356 = vmatprep.subr.mxu0 0.0
  %357 = vmatpush1.msra.mxu0 %v333
  %358 = vmatprep.subr.mxu0 0.0
  %359 = vmatpush1.msra.mxu0 %v332
  %360 = vmatprep.subr.mxu0 0.0
  %361 = vmatpush1.msra.mxu0 %v331
  %362 = vmatprep.subr.mxu0 0.0
  %363 = vmatpush1.msra.mxu0 %v330
  %364 = vmatprep.subr.mxu0 0.0
  %365 = vmatpush1.msra.mxu0 %v329
  %366 = vmatprep.subr.mxu0 0.0
  %367 = vmatpush1.msra.mxu0 %v328
  %368 = vmatprep.subr.mxu0 0.0
  %369 = vmatpush1.msra.mxu0 %v327
  %370 = vmatprep.subr.mxu0 0.0
  %371 = vmatpush1.msra.mxu0 %v326
  %372 = vmatprep.subr.mxu0 0.0
  %373 = vmatpush1.msra.mxu0 %v325
  %374 = vmatprep.subr.mxu0 0.0
  %375 = vmatpush1.msra.mxu0 %v324
  %376 = vmatprep.subr.mxu0 0.0
  %377 = vmatpush1.msra.mxu0 %v323
  %378 = vmatprep.subr.mxu0 0.0
  %379 = vmatpush1.msra.mxu0 %v322
  %380 = vmatprep.subr.mxu0 0.0
  %381 = vmatpush1.msra.mxu0 %v321
  %382 = vmatprep.subr.mxu0 0.0
  %383 = vmatpush1.msra.mxu0 %v320
  %384 = vmatprep.subr.mxu0 0.0
  %385 = vmatpush2.msra.mxu0 %v351
  %386 = vmatprep.subr.mxu0 0.0
  %387 = vmatpush2.msra.mxu0 %v350
  %388 = vmatprep.subr.mxu0 0.0
  %389 = vmatpush2.msra.mxu0 %v349
  %390 = vmatprep.subr.mxu0 0.0
  %391 = vmatpush2.msra.mxu0 %v348
  %392 = vmatprep.subr.mxu0 0.0
  %393 = vmatpush2.msra.mxu0 %v347
  %394 = vmatprep.subr.mxu0 0.0
  %395 = vmatpush2.msra.mxu0 %v346
  %396 = vmatprep.subr.mxu0 0.0
  %397 = vmatpush2.msra.mxu0 %v345
  %398 = vmatprep.subr.mxu0 0.0
  %399 = vmatpush2.msra.mxu0 %v344
  %400 = vmatprep.subr.mxu0 0.0
  %401 = vmatpush2.msra.mxu0 %v343
  %402 = vmatprep.subr.mxu0 0.0
  %403 = vmatpush2.msra.mxu0 %v342
  %404 = vmatprep.subr.mxu0 0.0
  %405 = vmatpush2.msra.mxu0 %v341
  %406 = vmatprep.subr.mxu0 0.0
  %407 = vmatpush2.msra.mxu0 %v340
  %408 = vmatprep.subr.mxu0 0.0
  %409 = vmatpush2.msra.mxu0 %v339
  %410 = vmatprep.subr.mxu0 0.0
  %411 = vmatpush2.msra.mxu0 %v338
  %412 = vmatprep.subr.mxu0 0.0
  %413 = vmatpush2.msra.mxu0 %v337
  %414 = vmatprep.subr.mxu0 0.0
  %415 = vmatpush2.msra.mxu0 %v336
  %416 = vmatprep.mubr.f32.mxu0 %v319
  %417 = vmatmul.mubr.f32.gmra.mxu0 %v318
  %v418 = vpop.f32.mrf.mxu0
  %v419 = vadd.f32 0.0, %v418
  %v420 = vpop.f32.mrf.mxu0
  %421 = vdwg.mxu0
  %v422 = vld [vmem:[%s8] sm:$0xff]
  %v423 = vld [vmem:[%s9] sm:$0x1]
  %v425 = vlaneseq
  %v426 = vshrl.u32 %v425, 7
  %v427 = vsub.s32 0, %v426
  %v428 = vrot.slane %v423, %v427
  %v431 = vsel %vm158, %v419, 0
  %433 = vmatprep.subr.mxu0 0.0
  %434 = vmatpush1.msra.mxu0 0.0
  %435 = vmatprep.subr.mxu0 0.0
  %436 = vmatpush1.msra.mxu0 0.0
  %437 = vmatprep.subr.mxu0 0.0
  %438 = vmatpush1.msra.mxu0 0.0
  %439 = vmatprep.subr.mxu0 0.0
  %440 = vmatpush1.msra.mxu0 0.0
  %441 = vmatprep.subr.mxu0 0.0
  %442 = vmatpush1.msra.mxu0 0.0
  %443 = vmatprep.subr.mxu0 0.0
  %444 = vmatpush1.msra.mxu0 0.0
  %445 = vmatprep.subr.mxu0 0.0
  %446 = vmatpush1.msra.mxu0 0.0
  %447 = vmatprep.subr.mxu0 0.0
  %448 = vmatpush1.msra.mxu0 0.0
  %449 = vmatprep.subr.mxu0 0.0
  %450 = vmatpush1.msra.mxu0 0.0
  %451 = vmatprep.subr.mxu0 0.0
  %452 = vmatpush1.msra.mxu0 0.0
  %453 = vmatprep.subr.mxu0 0.0
  %454 = vmatpush1.msra.mxu0 0.0
  %455 = vmatprep.subr.mxu0 0.0
  %456 = vmatpush1.msra.mxu0 0.0
  %457 = vmatprep.subr.mxu0 0.0
  %458 = vmatpush1.msra.mxu0 0.0
  %459 = vmatprep.subr.mxu0 0.0
  %460 = vmatpush1.msra.mxu0 0.0
  %461 = vmatprep.subr.mxu0 0.0
  %462 = vmatpush1.msra.mxu0 0.0
  %463 = vmatprep.subr.mxu0 0.0
  %464 = vmatpush1.msra.mxu0 %v422
  %465 = vmatprep.subr.mxu0 0.0
  %466 = vmatpush2.msra.mxu0 0.0
  %467 = vmatprep.subr.mxu0 0.0
  %468 = vmatpush2.msra.mxu0 0.0
  %469 = vmatprep.subr.mxu0 0.0
  %470 = vmatpush2.msra.mxu0 0.0
  %471 = vmatprep.subr.mxu0 0.0
  %472 = vmatpush2.msra.mxu0 0.0
  %473 = vmatprep.subr.mxu0 0.0
  %474 = vmatpush2.msra.mxu0 0.0
  %475 = vmatprep.subr.mxu0 0.0
  %476 = vmatpush2.msra.mxu0 0.0
  %477 = vmatprep.subr.mxu0 0.0
  %478 = vmatpush2.msra.mxu0 0.0
  %479 = vmatprep.subr.mxu0 0.0
  %480 = vmatpush2.msra.mxu0 0.0
  %481 = vmatprep.subr.mxu0 0.0
  %482 = vmatpush2.msra.mxu0 0.0
  %483 = vmatprep.subr.mxu0 0.0
  %484 = vmatpush2.msra.mxu0 0.0
  %485 = vmatprep.subr.mxu0 0.0
  %486 = vmatpush2.msra.mxu0 0.0
  %487 = vmatprep.subr.mxu0 0.0
  %488 = vmatpush2.msra.mxu0 0.0
  %489 = vmatprep.subr.mxu0 0.0
  %490 = vmatpush2.msra.mxu0 0.0
  %491 = vmatprep.subr.mxu0 0.0
  %492 = vmatpush2.msra.mxu0 0.0
  %493 = vmatprep.subr.mxu0 0.0
  %494 = vmatpush2.msra.mxu0 0.0
  %495 = vmatprep.subr.mxu0 0.0
  %496 = vmatpush2.msra.mxu0 0.0
  %497 = vmatprep.mubr.f32.mxu0 0.0
  %498 = vmatmul.mubr.f32.gmra.mxu0 %v431
  %v499 = vpop.f32.mrf.mxu0
  %v500 = vadd.f32 %v428, %v499
  %v501 = vpop.f32.mrf.mxu0
  %502 = vdwg.mxu0
  %v503 = vld [vmem:[%s10] sm:$0xff]
  %v504 = vld [vmem:[%s11] sm:$0xff]
  %506 = vset.pattern.permute.xlu0 0
  %507 = vperm.xlu0 %506, %v504
  %v508 = vpop.permute.xlu0 %507
  %v511 = vsel %vm158, %v503, 0
  %513 = vmatprep.subr.mxu0 0.0
  %514 = vmatpush1.msra.mxu0 0.0
  %515 = vmatprep.subr.mxu0 0.0
  %516 = vmatpush1.msra.mxu0 0.0
  %517 = vmatprep.subr.mxu0 0.0
  %518 = vmatpush1.msra.mxu0 0.0
  %519 = vmatprep.subr.mxu0 0.0
  %520 = vmatpush1.msra.mxu0 0.0
  %521 = vmatprep.subr.mxu0 0.0
  %522 = vmatpush1.msra.mxu0 0.0
  %523 = vmatprep.subr.mxu0 0.0
  %524 = vmatpush1.msra.mxu0 0.0
  %525 = vmatprep.subr.mxu0 0.0
  %526 = vmatpush1.msra.mxu0 0.0
  %527 = vmatprep.subr.mxu0 0.0
  %528 = vmatpush1.msra.mxu0 0.0
  %529 = vmatprep.subr.mxu0 0.0
  %530 = vmatpush1.msra.mxu0 0.0
  %531 = vmatprep.subr.mxu0 0.0
  %532 = vmatpush1.msra.mxu0 0.0
  %533 = vmatprep.subr.mxu0 0.0
  %534 = vmatpush1.msra.mxu0 0.0
  %535 = vmatprep.subr.mxu0 0.0
  %536 = vmatpush1.msra.mxu0 0.0
  %537 = vmatprep.subr.mxu0 0.0
  %538 = vmatpush1.msra.mxu0 0.0
  %539 = vmatprep.subr.mxu0 0.0
  %540 = vmatpush1.msra.mxu0 0.0
  %541 = vmatprep.subr.mxu0 0.0
  %542 = vmatpush1.msra.mxu0 0.0
  %543 = vmatprep.subr.mxu0 0.0
  %544 = vmatpush1.msra.mxu0 %v500
  %545 = vmatprep.subr.mxu0 0.0
  %546 = vmatpush2.msra.mxu0 0.0
  %547 = vmatprep.subr.mxu0 0.0
  %548 = vmatpush2.msra.mxu0 0.0
  %549 = vmatprep.subr.mxu0 0.0
  %550 = vmatpush2.msra.mxu0 0.0
  %551 = vmatprep.subr.mxu0 0.0
  %552 = vmatpush2.msra.mxu0 0.0
  %553 = vmatprep.subr.mxu0 0.0
  %554 = vmatpush2.msra.mxu0 0.0
  %555 = vmatprep.subr.mxu0 0.0
  %556 = vmatpush2.msra.mxu0 0.0
  %557 = vmatprep.subr.mxu0 0.0
  %558 = vmatpush2.msra.mxu0 0.0
  %559 = vmatprep.subr.mxu0 0.0
  %560 = vmatpush2.msra.mxu0 0.0
  %561 = vmatprep.subr.mxu0 0.0
  %562 = vmatpush2.msra.mxu0 0.0
  %563 = vmatprep.subr.mxu0 0.0
  %564 = vmatpush2.msra.mxu0 0.0
  %565 = vmatprep.subr.mxu0 0.0
  %566 = vmatpush2.msra.mxu0 0.0
  %567 = vmatprep.subr.mxu0 0.0
  %568 = vmatpush2.msra.mxu0 0.0
  %569 = vmatprep.subr.mxu0 0.0
  %570 = vmatpush2.msra.mxu0 0.0
  %571 = vmatprep.subr.mxu0 0.0
  %572 = vmatpush2.msra.mxu0 0.0
  %573 = vmatprep.subr.mxu0 0.0
  %574 = vmatpush2.msra.mxu0 0.0
  %575 = vmatprep.subr.mxu0 0.0
  %576 = vmatpush2.msra.mxu0 0.0
  %577 = vmatprep.mubr.f32.mxu0 0.0
  %578 = vmatmul.mubr.f32.gmra.mxu0 %v511
  %v579 = vpop.f32.mrf.mxu0
  %v580 = vadd.f32 %v508, %v579
  %v581 = vpop.f32.mrf.mxu0
  %582 = vdwg.mxu0
  %v583 = vmax.f32 %v580, 0.0
  %v584 = vsub.f32 0.0, %v583
  %v585 = vmul.f32 %v584, 1.442695
  %v586 = vpow.pop %v585
  %v587 = vadd.f32 %v586, 1.0
  %v588 = vrcp.pop %v587
  %v589 = vld [vmem:[%s12] sm:$0x3]
  %v590 = vmul.f32 %v317, %v588
  %v592 = vsel %vm158, %v589, 0
  %594 = vmatprep.subr.mxu0 0.0
  %595 = vmatpush1.msra.mxu0 0.0
  %596 = vmatprep.subr.mxu0 0.0
  %597 = vmatpush1.msra.mxu0 0.0
  %598 = vmatprep.subr.mxu0 0.0
  %599 = vmatpush1.msra.mxu0 0.0
  %600 = vmatprep.subr.mxu0 0.0
  %601 = vmatpush1.msra.mxu0 0.0
  %602 = vmatprep.subr.mxu0 0.0
  %603 = vmatpush1.msra.mxu0 0.0
  %604 = vmatprep.subr.mxu0 0.0
  %605 = vmatpush1.msra.mxu0 0.0
  %606 = vmatprep.subr.mxu0 0.0
  %607 = vmatpush1.msra.mxu0 0.0
  %608 = vmatprep.subr.mxu0 0.0
  %609 = vmatpush1.msra.mxu0 0.0
  %610 = vmatprep.subr.mxu0 0.0
  %611 = vmatpush1.msra.mxu0 0.0
  %612 = vmatprep.subr.mxu0 0.0
  %613 = vmatpush1.msra.mxu0 0.0
  %614 = vmatprep.subr.mxu0 0.0
  %615 = vmatpush1.msra.mxu0 0.0
  %616 = vmatprep.subr.mxu0 0.0
  %617 = vmatpush1.msra.mxu0 0.0
  %618 = vmatprep.subr.mxu0 0.0
  %619 = vmatpush1.msra.mxu0 0.0
  %620 = vmatprep.subr.mxu0 0.0
  %621 = vmatpush1.msra.mxu0 0.0
  %622 = vmatprep.subr.mxu0 0.0
  %623 = vmatpush1.msra.mxu0 0.0
  %624 = vmatprep.subr.mxu0 0.0
  %625 = vmatpush1.msra.mxu0 %v590
  %626 = vmatprep.subr.mxu0 0.0
  %627 = vmatpush2.msra.mxu0 0.0
  %628 = vmatprep.subr.mxu0 0.0
  %629 = vmatpush2.msra.mxu0 0.0
  %630 = vmatprep.subr.mxu0 0.0
  %631 = vmatpush2.msra.mxu0 0.0
  %632 = vmatprep.subr.mxu0 0.0
  %633 = vmatpush2.msra.mxu0 0.0
  %634 = vmatprep.subr.mxu0 0.0
  %635 = vmatpush2.msra.mxu0 0.0
  %636 = vmatprep.subr.mxu0 0.0
  %637 = vmatpush2.msra.mxu0 0.0
  %638 = vmatprep.subr.mxu0 0.0
  %639 = vmatpush2.msra.mxu0 0.0
  %640 = vmatprep.subr.mxu0 0.0
  %641 = vmatpush2.msra.mxu0 0.0
  %642 = vmatprep.subr.mxu0 0.0
  %643 = vmatpush2.msra.mxu0 0.0
  %644 = vmatprep.subr.mxu0 0.0
  %645 = vmatpush2.msra.mxu0 0.0
  %646 = vmatprep.subr.mxu0 0.0
  %647 = vmatpush2.msra.mxu0 0.0
  %648 = vmatprep.subr.mxu0 0.0
  %649 = vmatpush2.msra.mxu0 0.0
  %650 = vmatprep.subr.mxu0 0.0
  %651 = vmatpush2.msra.mxu0 0.0
  %652 = vmatprep.subr.mxu0 0.0
  %653 = vmatpush2.msra.mxu0 0.0
  %654 = vmatprep.subr.mxu0 0.0
  %655 = vmatpush2.msra.mxu0 0.0
  %656 = vmatprep.subr.mxu0 0.0
  %657 = vmatpush2.msra.mxu0 0.0
  %658 = vmatprep.mubr.f32.mxu0 0.0
  %659 = vmatmul.mubr.f32.gmra.mxu0 %v592
  %v660 = vpop.f32.mrf.mxu0
  %v661 = vadd.f32 0.0, %v660
  %v662 = vpop.f32.mrf.mxu0
  %663 = vdwg.mxu0
  %664 = vmatprep.subr.mxu0 0.0
  %665 = vmatpush1.msra.mxu0 0.0
  %666 = vmatprep.subr.mxu0 0.0
  %667 = vmatpush1.msra.mxu0 0.0
  %668 = vmatprep.subr.mxu0 0.0
  %669 = vmatpush1.msra.mxu0 0.0
  %670 = vmatprep.subr.mxu0 0.0
  %671 = vmatpush1.msra.mxu0 0.0
  %672 = vmatprep.subr.mxu0 0.0
  %673 = vmatpush1.msra.mxu0 0.0
  %674 = vmatprep.subr.mxu0 0.0
  %675 = vmatpush1.msra.mxu0 0.0
  %676 = vmatprep.subr.mxu0 0.0
  %677 = vmatpush1.msra.mxu0 0.0
  %678 = vmatprep.subr.mxu0 0.0
  %679 = vmatpush1.msra.mxu0 0.0
  %680 = vmatprep.subr.mxu0 0.0
  %681 = vmatpush1.msra.mxu0 0.0
  %682 = vmatprep.subr.mxu0 0.0
  %683 = vmatpush1.msra.mxu0 0.0
  %684 = vmatprep.subr.mxu0 0.0
  %685 = vmatpush1.msra.mxu0 0.0
  %686 = vmatprep.subr.mxu0 0.0
  %687 = vmatpush1.msra.mxu0 0.0
  %688 = vmatprep.subr.mxu0 0.0
  %689 = vmatpush1.msra.mxu0 0.0
  %690 = vmatprep.subr.mxu0 0.0
  %691 = vmatpush1.msra.mxu0 0.0
  %692 = vmatprep.subr.mxu0 0.0
  %693 = vmatpush1.msra.mxu0 0.0
  %694 = vmatprep.subr.mxu0 0.0
  %695 = vmatpush1.msra.mxu0 %v317
  %696 = vmatprep.subr.mxu0 0.0
  %697 = vmatpush2.msra.mxu0 0.0
  %698 = vmatprep.subr.mxu0 0.0
  %699 = vmatpush2.msra.mxu0 0.0
  %700 = vmatprep.subr.mxu0 0.0
  %701 = vmatpush2.msra.mxu0 0.0
  %702 = vmatprep.subr.mxu0 0.0
  %703 = vmatpush2.msra.mxu0 0.0
  %704 = vmatprep.subr.mxu0 0.0
  %705 = vmatpush2.msra.mxu0 0.0
  %706 = vmatprep.subr.mxu0 0.0
  %707 = vmatpush2.msra.mxu0 0.0
  %708 = vmatprep.subr.mxu0 0.0
  %709 = vmatpush2.msra.mxu0 0.0
  %710 = vmatprep.subr.mxu0 0.0
  %711 = vmatpush2.msra.mxu0 0.0
  %712 = vmatprep.subr.mxu0 0.0
  %713 = vmatpush2.msra.mxu0 0.0
  %714 = vmatprep.subr.mxu0 0.0
  %715 = vmatpush2.msra.mxu0 0.0
  %716 = vmatprep.subr.mxu0 0.0
  %717 = vmatpush2.msra.mxu0 0.0
  %718 = vmatprep.subr.mxu0 0.0
  %719 = vmatpush2.msra.mxu0 0.0
  %720 = vmatprep.subr.mxu0 0.0
  %721 = vmatpush2.msra.mxu0 0.0
  %722 = vmatprep.subr.mxu0 0.0
  %723 = vmatpush2.msra.mxu0 0.0
  %724 = vmatprep.subr.mxu0 0.0
  %725 = vmatpush2.msra.mxu0 0.0
  %726 = vmatprep.subr.mxu0 0.0
  %727 = vmatpush2.msra.mxu0 0.0
  %728 = vmatprep.mubr.f32.mxu0 0.0
  %729 = vmatmul.mubr.f32.gmra.mxu0 %v592
  %v730 = vpop.f32.mrf.mxu0
  %v731 = vadd.f32 0.0, %v730
  %v732 = vpop.f32.mrf.mxu0
  %733 = vdwg.mxu0
  %734 = vmatprep.subr.mxu0 0.0
  %735 = vmatpush1.msra.mxu0 0.0
  %736 = vmatprep.subr.mxu0 0.0
  %737 = vmatpush1.msra.mxu0 0.0
  %738 = vmatprep.subr.mxu0 0.0
  %739 = vmatpush1.msra.mxu0 0.0
  %740 = vmatprep.subr.mxu0 0.0
  %741 = vmatpush1.msra.mxu0 0.0
  %742 = vmatprep.subr.mxu0 0.0
  %743 = vmatpush1.msra.mxu0 0.0
  %744 = vmatprep.subr.mxu0 0.0
  %745 = vmatpush1.msra.mxu0 0.0
  %746 = vmatprep.subr.mxu0 0.0
  %747 = vmatpush1.msra.mxu0 0.0
  %748 = vmatprep.subr.mxu0 0.0
  %749 = vmatpush1.msra.mxu0 0.0
  %750 = vmatprep.subr.mxu0 0.0
  %751 = vmatpush1.msra.mxu0 0.0
  %752 = vmatprep.subr.mxu0 0.0
  %753 = vmatpush1.msra.mxu0 0.0
  %754 = vmatprep.subr.mxu0 0.0
  %755 = vmatpush1.msra.mxu0 0.0
  %756 = vmatprep.subr.mxu0 0.0
  %757 = vmatpush1.msra.mxu0 0.0
  %758 = vmatprep.subr.mxu0 0.0
  %759 = vmatpush1.msra.mxu0 0.0
  %760 = vmatprep.subr.mxu0 0.0
  %761 = vmatpush1.msra.mxu0 0.0
  %762 = vmatprep.subr.mxu0 0.0
  %763 = vmatpush1.msra.mxu0 0.0
  %764 = vmatprep.subr.mxu0 0.0
  %765 = vmatpush1.msra.mxu0 %v588
  %766 = vmatprep.subr.mxu0 0.0
  %767 = vmatpush2.msra.mxu0 0.0
  %768 = vmatprep.subr.mxu0 0.0
  %769 = vmatpush2.msra.mxu0 0.0
  %770 = vmatprep.subr.mxu0 0.0
  %771 = vmatpush2.msra.mxu0 0.0
  %772 = vmatprep.subr.mxu0 0.0
  %773 = vmatpush2.msra.mxu0 0.0
  %774 = vmatprep.subr.mxu0 0.0
  %775 = vmatpush2.msra.mxu0 0.0
  %776 = vmatprep.subr.mxu0 0.0
  %777 = vmatpush2.msra.mxu0 0.0
  %778 = vmatprep.subr.mxu0 0.0
  %779 = vmatpush2.msra.mxu0 0.0
  %780 = vmatprep.subr.mxu0 0.0
  %781 = vmatpush2.msra.mxu0 0.0
  %782 = vmatprep.subr.mxu0 0.0
  %783 = vmatpush2.msra.mxu0 0.0
  %784 = vmatprep.subr.mxu0 0.0
  %785 = vmatpush2.msra.mxu0 0.0
  %786 = vmatprep.subr.mxu0 0.0
  %787 = vmatpush2.msra.mxu0 0.0
  %788 = vmatprep.subr.mxu0 0.0
  %789 = vmatpush2.msra.mxu0 0.0
  %790 = vmatprep.subr.mxu0 0.0
  %791 = vmatpush2.msra.mxu0 0.0
  %792 = vmatprep.subr.mxu0 0.0
  %793 = vmatpush2.msra.mxu0 0.0
  %794 = vmatprep.subr.mxu0 0.0
  %795 = vmatpush2.msra.mxu0 0.0
  %796 = vmatprep.subr.mxu0 0.0
  %797 = vmatpush2.msra.mxu0 0.0
  %798 = vmatprep.mubr.f32.mxu0 0.0
  %799 = vmatmul.mubr.f32.gmra.mxu0 %v592
  %v800 = vpop.f32.mrf.mxu0
  %v801 = vadd.f32 0.0, %v800
  %v802 = vpop.f32.mrf.mxu0
  %803 = vdwg.mxu0
  %vm804 = vcmask 58368
  %v805 = vsel %vm804, %v661, 0.0
  %806 = vadd.xlane.f32.xlu0 %v805
  %v807 = vpop.xlane.xlu0 %806
  %vm808 = vcmask 1024
  %809 = vst.msk [vmem:[%s13] sm:$0x3] %vm808, %v807
  %v810 = vsel %vm804, %v731, 0.0
  %811 = vadd.xlane.f32.xlu0 %v810
  %v812 = vpop.xlane.xlu0 %811
  %v813 = vsel %vm804, %v801, 0.0
  %814 = vadd.xlane.f32.xlu0 %v813
  %v815 = vpop.xlane.xlu0 %814
  %v816 = vadd.f32 %v812, %v815
  %817 = vst.msk [vmem:[%s14] sm:$0x3] %vm808, %v816
  // Predicated region
  $region54: #{tpu_custom_call.1} parent=0 // pred_check
    _
  $region55: #{tpu_custom_call.1} parent=0 // pred_check_branch
    %819 = sbr.rel (0) target = $region57
  $region56: #{tpu_custom_call.1} parent=0 // pred_region
    _
  $region57: #{tpu_custom_call.1} parent=0 // pred_fallthru
    _
  // Predicated region
  $region58: #{tpu_custom_call.1} parent=0 // pred_check
    _
  $region59: #{tpu_custom_call.1} parent=0 // pred_check_branch
    %821 = sbr.rel (0) target = $region61
  $region60: #{tpu_custom_call.1} parent=0 // pred_region
    _
  $region61: #{tpu_custom_call.1} parent=0 // pred_fallthru
    _
  // Predicated region
  $region62: #{tpu_custom_call.1} parent=0 // pred_check
    _
  $region63: #{tpu_custom_call.1} parent=0 // pred_check_branch
    %823 = sbr.rel (0) target = $region65
  $region64: #{tpu_custom_call.1} parent=0 // pred_region
    _
  $region65: #{tpu_custom_call.1} parent=0 // pred_fallthru
    _
  // Predicated region
  $region66: #{tpu_custom_call.1} parent=0 // pred_check
    _
  $region67: #{tpu_custom_call.1} parent=0 // pred_check_branch
    %825 = sbr.rel (0) target = $region69
  $region68: #{tpu_custom_call.1} parent=0 // pred_region
    _
  $region69: #{tpu_custom_call.1} parent=0 // pred_fallthru
    _

</llo_original>
